<compile_context>
chip_gen: v6e
topology: v6e:2x2x1
jax: 0.10.0
libtpu: 0.0.40
codegen_flags: <defaults>
</compile_context>

<pallas_src>
import jax
import jax.numpy as jnp
from jax.experimental import pallas as pl
from jax.experimental.pallas import tpu as pltpu


# -----------------------------------------------------------------------------
# VMEM budget helper (generation aware: ~48 MiB on v7x, ~96 MiB on v5e/v6e).
# -----------------------------------------------------------------------------
def _vmem_budget_bytes() -> int:
    cap = 64 * 1024 * 1024  # conservative default = v7x physical VMEM per TC
    try:
        info = pltpu.get_tpu_info()
        cap = int(getattr(info, "vmem_capacity_bytes", cap))
    except Exception:
        pass
    cap = min(cap, 128 * 1024 * 1024)
    return (cap * 3) // 4  # leave headroom for compiler scratch / semaphores


def _round_up(v: int, m: int) -> int:
    return pl.cdiv(v, m) * m


# -----------------------------------------------------------------------------
# Kernel 1: full reduction axis resident per tile (tile over features only).
# -----------------------------------------------------------------------------
def _softmax_full_kernel(x_ref, o_ref):
    x = x_ref[...].astype(jnp.float32)                  # f32 intermediates
    x_max = jnp.max(x, axis=0, keepdims=True)           # [1, td]
    x_exp = jnp.exp(x - x_max)                          # [N, td]
    sum_exp = jnp.sum(x_exp, axis=0, keepdims=True)     # [1, td]
    inv = pl.reciprocal(sum_exp, approx=False)          # exact, keeps 1e-6 parity
    o_ref[...] = (x_exp * inv).astype(o_ref.dtype)


# -----------------------------------------------------------------------------
# Kernel 2: online softmax for long reduction axes.
# Grid = (feature tiles, pass in {0: stats, 1: normalize}, reduction tiles).
# Running max / running sum live in VMEM scratch and persist across the grid.
# -----------------------------------------------------------------------------
def _softmax_online_kernel(x_ref, o_ref, m_ref, l_ref):
    p = pl.program_id(1)   # 0 = accumulate stats, 1 = write normalized output
    i = pl.program_id(2)   # tile index along the reduction axis

    @pl.when(jnp.logical_and(p == 0, i == 0))
    def _init():
        m_ref[...] = jnp.full_like(m_ref, -jnp.inf)
        l_ref[...] = jnp.zeros_like(l_ref)

    @pl.when(p == 0)
    def _stats():
        x = x_ref[...].astype(jnp.float32)
        m_prev = m_ref[...]
        m_new = jnp.maximum(m_prev, jnp.max(x, axis=0, keepdims=True))
        l_ref[...] = l_ref[...] * jnp.exp(m_prev - m_new) + jnp.sum(
            jnp.exp(x - m_new), axis=0, keepdims=True)
        m_ref[...] = m_new

    @pl.when(p == 1)
    def _normalize():
        x = x_ref[...].astype(jnp.float32)
        inv_l = pl.reciprocal(l_ref[...], approx=False)
        o_ref[...] = (jnp.exp(x - m_ref[...]) * inv_l).astype(o_ref.dtype)


# -----------------------------------------------------------------------------
# Wrapper
# -----------------------------------------------------------------------------
def softmax_stable(x: jax.Array, *, force_online: bool = False) -> jax.Array:
    """Numerically-stable softmax along axis 0 of a 2-D [N, D] array."""
    assert x.ndim == 2, "kernel expects a 2-D [N, D] input"
    n, d = x.shape
    dtype = x.dtype
    itemsize = jnp.dtype(dtype).itemsize
    budget = _vmem_budget_bytes()

    # Bytes per feature lane needed to keep the whole reduction axis resident:
    # double-buffered input + output blocks plus ~3 f32 temporaries.
    per_lane_bytes = n * (4 * itemsize + 3 * 4)
    use_full_n = (not force_online) and (per_lane_bytes * 128 <= budget)

    if use_full_n:
        # ---- full-reduction-axis-resident path --------------------------------
        d128 = _round_up(d, 128)
        td = min(4096, (budget // per_lane_bytes // 128) * 128, d128)
        # Prefer >=2 feature tiles so v7x megacore can shard the parallel axis.
        if td >= d128 and d128 >= 256:
            td = max(128, ((d128 // 2) // 128) * 128)
        d_pad = _round_up(d, td)
        xp = x if d_pad == d else jnp.pad(x, ((0, 0), (0, d_pad - d)))

        out = pl.pallas_call(
            _softmax_full_kernel,
            out_shape=jax.ShapeDtypeStruct((n, d_pad), dtype),
            grid_spec=pltpu.PrefetchScalarGridSpec(
                num_scalar_prefetch=0,
                grid=(d_pad // td,),
                in_specs=[pl.BlockSpec((n, td), lambda j: (0, j))],
                out_specs=pl.BlockSpec((n, td), lambda j: (0, j)),
            ),
            compiler_params=pltpu.CompilerParams(
                dimension_semantics=("parallel",),
                vmem_limit_bytes=budget,
            ),
        )(xp)
    else:
        # ---- online-softmax path (reduction axis tiled) ------------------------
        td = min(512, _round_up(d, 128))
        d_pad = _round_up(d, td)
        tn = min(512, _round_up(n, 8))
        n_pad = _round_up(n, tn)

        xp = x
        if d_pad != d:
            xp = jnp.pad(xp, ((0, 0), (0, d_pad - d)))            # zeros: harmless
        if n_pad != n:
            xp = jnp.pad(xp, ((0, n_pad - n), (0, 0)),
                         constant_values=-jnp.inf)                # exp(-inf) = 0

        out = pl.pallas_call(
            _softmax_online_kernel,
            out_shape=jax.ShapeDtypeStruct((n_pad, d_pad), dtype),
            grid_spec=pltpu.PrefetchScalarGridSpec(
                num_scalar_prefetch=0,
                # (feature tiles, pass {stats, normalize}, reduction tiles)
                grid=(d_pad // td, 2, n_pad // tn),
                in_specs=[pl.BlockSpec((tn, td), lambda j, p, i: (i, j))],
                # During the stats pass (p=0) the output block index is pinned to
                # (0, j) so nothing is written back; the normalize pass (p=1)
                # then streams each output block (i, j) exactly once.
                out_specs=pl.BlockSpec((tn, td), lambda j, p, i: (i * p, j)),
                scratch_shapes=[pltpu.VMEM((1, td), jnp.float32),   # running max
                                pltpu.VMEM((1, td), jnp.float32)],  # running sum
            ),
            compiler_params=pltpu.CompilerParams(
                dimension_semantics=("parallel", "arbitrary", "arbitrary"),
                vmem_limit_bytes=budget,
            ),
        )(xp)

    if out.shape != (n, d):
        out = out[:n, :d]
    return out


if __name__ == "__main__":
    key = jax.random.PRNGKey(0)
    k1, k2, k3, k4 = jax.random.split(key, 4)

    # 1) Small shape implied by the module: 8 rows (reduction axis), 128 features.
    x = jax.random.normal(k1, (8, 128), dtype=jnp.float32)
    out = jax.block_until_ready(softmax_stable(x))
    ref = jax.nn.softmax(x, axis=0)
    assert jnp.allclose(out, ref, atol=1e-6, rtol=1e-6), "full-N path mismatch"

    # 2) Feature axis not a multiple of 128: padded last tile, 2-tile grid.
    x2 = jax.random.normal(k2, (16, 200), dtype=jnp.float32)
    out2 = jax.block_until_ready(softmax_stable(x2))
    ref2 = jax.nn.softmax(x2, axis=0)
    assert jnp.allclose(out2, ref2, atol=1e-6, rtol=1e-6), "padded-D path mismatch"

    # 3) Online-softmax path (tiled reduction axis), forced at a small shape so
    #    the large-N path is exercised; padding on both axes.
    x3 = jax.random.normal(k3, (600, 200), dtype=jnp.float32)
    out3 = jax.block_until_ready(softmax_stable(x3, force_online=True))
    ref3 = jax.nn.softmax(x3, axis=0)
    assert jnp.allclose(out3, ref3, atol=1e-5, rtol=1e-5), "online path mismatch"

    # 4) bf16 I/O with f32 intermediates.
    x4 = jax.random.normal(k4, (16, 128), dtype=jnp.bfloat16)
    out4 = jax.block_until_ready(softmax_stable(x4))
    ref4 = jax.nn.softmax(x4.astype(jnp.float32), axis=0)
    assert jnp.allclose(out4.astype(jnp.float32), ref4, atol=8e-3, rtol=2e-2), \
        "bf16 path mismatch"

    print("KERNEL_OK")
</pallas_src>

<mosaic_0001>
module attributes {stable_mosaic.version = 11 : i64} {
  func.func @_softmax_full_kernel(%arg0: i32, %arg1: memref<8x128xf32, #tpu.memory_space<vmem>>, %arg2: memref<8x128xf32, #tpu.memory_space<vmem>>) attributes {dimension_semantics = [#tpu.dimension_semantics<parallel>], iteration_bounds = array<i64: 1>, scalar_prefetch = 0 : i64, scratch_operands = 0 : i64, tpu.core_type = #tpu.core_type<tc>, window_params = [{transform_indices = @transform_0, window_bounds = array<i64: 8, 128>}, {transform_indices = @transform_1, window_bounds = array<i64: 8, 128>}]} {
    %c0 = arith.constant 0 : index
    %c0_0 = arith.constant 0 : index
    %0 = vector.load %arg1[%c0, %c0_0] : memref<8x128xf32, #tpu.memory_space<vmem>>, vector<8x128xf32>
    %cst = arith.constant dense<0xFF800000> : vector<128xf32>
    %1 = vector.multi_reduction <maximumf>, %0, %cst [0] : vector<8x128xf32> to vector<128xf32>
    %2 = vector.shape_cast %1 : vector<128xf32> to vector<1x128xf32>
    %3 = vector.broadcast %2 : vector<1x128xf32> to vector<8x128xf32>
    %4 = arith.subf %0, %3 : vector<8x128xf32>
    %5 = math.exp %4 : vector<8x128xf32>
    %cst_1 = arith.constant dense<0.000000e+00> : vector<128xf32>
    %6 = vector.multi_reduction <add>, %5, %cst_1 [0] : vector<8x128xf32> to vector<128xf32>
    %7 = vector.shape_cast %6 : vector<128xf32> to vector<1x128xf32>
    %8 = tpu.reciprocal %7 : vector<1x128xf32> -> vector<1x128xf32>
    %9 = vector.broadcast %8 : vector<1x128xf32> to vector<8x128xf32>
    %10 = arith.mulf %5, %9 : vector<8x128xf32>
    %c0_2 = arith.constant 0 : index
    %c0_3 = arith.constant 0 : index
    %11 = vector.load %arg2[%c0_2, %c0_3] : memref<8x128xf32, #tpu.memory_space<vmem>>, vector<8x128xf32>
    tpu.vector_store %arg2[%c0_2, %c0_3], %10 {strides = array<i32>} : memref<8x128xf32, #tpu.memory_space<vmem>>, vector<8x128xf32>,
    return
  }
  func.func @transform_0(%arg0: i32) -> (i32, i32) {
    %c0_i32 = arith.constant 0 : i32
    %c0_i32_0 = arith.constant 0 : i32
    return %c0_i32, %arg0 : i32, i32
  }
  func.func @transform_1(%arg0: i32) -> (i32, i32) {
    %c0_i32 = arith.constant 0 : i32
    %c0_i32_0 = arith.constant 0 : i32
    return %c0_i32, %arg0 : i32, i32
  }
}

</mosaic_0001>

<llo_original>
// kernel: tpu_custom_call.1
$region0: #{tpu_custom_call.1}
  #allocation0 [shape = 'u32[]', space=smem, size = 0x4, offset = 0x4, fixed_abs, tag = 'smem constant byte address 0x4 - core index']
  #allocation1 [shape = 'u32[144,128]{1,0:T(1,128)}', space=vmem, size = 0x12000, scoped, tag = 'internal scratch']
  %s0 = inlined_call_operand.hbm [shape: f32[8,128], index: 0, kind: input, shape index: {}]
  %s1 = inlined_call_operand.hbm [shape: f32[8,128], index: 1, kind: output, shape index: {}]
  %s2 = sld [smem:[#allocation0]]
  $region18: #{tpu_custom_call.1} parent=0
    _
  %s4 = ssub.s32 1, %s2
  %s5 = scalar_select 0, %s4, %s2
  $region1: #{tpu_custom_call.1} parent=0
    #allocation2 [shape = 'u8[4096]{0}', space=vmem, size = 0x1000, scoped, tag = 'input window, operand 0, single buffered']
    #allocation3 [shape = 's32[1]{0}', space=sflag, size = 0x4, scoped, tag = 'scoped memory for tpu_custom_call.1']
    #allocation4 [shape = 's32[1]{0}', space=sflag, size = 0x4, scoped, tag = 'scoped memory for tpu_custom_call.1']
    #allocation5 [shape = 'u8[4096]{0}', space=vmem, size = 0x1000, scoped, tag = 'output window, operand 0, single buffered']
    %6 = vsyncpa [#allocation3], 0
    %7 = vsyncpa [#allocation4], 0
    // Predicated region
    $region2: #{tpu_custom_call.1} parent=1 // pred_check
      _
    $region3: #{tpu_custom_call.1} parent=1 // pred_check_branch
      %9 = sbr.rel (0) target = $region5
    $region4: #{tpu_custom_call.1} parent=1 // pred_region
      %s11 = ssub.s32 128, 128
      %12 = vsyncadd [#allocation3], %s11
      %s14 = sshll.u32 [#allocation2], 4
      %s15 = int_to_ptr.vmem [resolvable:$true] %s14
      %17 = dma.hbm_to_vmem [thread:$0]  %s0, 128, %s15, [#allocation3]
    $region5: #{tpu_custom_call.1} parent=1 // pred_fallthru
      _
    // Predicated region
    $region6: #{tpu_custom_call.1} parent=1 // pred_check
      _
    $region7: #{tpu_custom_call.1} parent=1 // pred_check_branch
      %19 = sbr.rel (0) target = $region9
    $region8: #{tpu_custom_call.1} parent=1 // pred_region
      %20 = dma.done [#allocation3], 128
    $region9: #{tpu_custom_call.1} parent=1 // pred_fallthru
      _
    %v21 = vld [vmem:[#allocation2] sm:$0xff]
    %v22 = vrot.slane %v21, 4
    %v23 = vmax.f32 %v21, %v22
    %v24 = vrot.slane %v23, 2
    %v25 = vmax.f32 %v23, %v24
    %v26 = vrot.slane %v25, 1
    %v27 = vmax.f32 %v25, %v26
    %v28 = vsub.f32 %v21, %v27
    %v29 = vmul.f32 %v28, 1.442695
    %v30 = vpow.pop %v29
    %v31 = vrot.slane %v30, 4
    %v32 = vadd.f32 %v30, %v31
    %v33 = vrot.slane %v32, 2
    %v34 = vadd.f32 %v32, %v33
    %v35 = vrot.slane %v34, 1
    %v36 = vadd.f32 %v34, %v35
    %v37 = vrcp.pop %v36
    %v38 = vmul.f32 %v30, %v37
    %39 = vst [vmem:[#allocation5] sm:$0xff] %v38
    // Predicated region
    $region10: #{tpu_custom_call.1} parent=1 // pred_check
      _
    $region11: #{tpu_custom_call.1} parent=1 // pred_check_branch
      %41 = sbr.rel (0) target = $region13
    $region12: #{tpu_custom_call.1} parent=1 // pred_region
      %s43 = ssub.s32 128, 128
      %44 = vsyncadd [#allocation4], %s43
      %s46 = sshll.u32 [#allocation5], 4
      %s47 = int_to_ptr.vmem [resolvable:$true] %s46
      %49 = dma.vmem_to_hbm [thread:$0]  %s47, 128, %s1, [#allocation4]
    $region13: #{tpu_custom_call.1} parent=1 // pred_fallthru
      _
    // Predicated region
    $region14: #{tpu_custom_call.1} parent=1 // pred_check
      _
    $region15: #{tpu_custom_call.1} parent=1 // pred_check_branch
      %51 = sbr.rel (0) target = $region17
    $region16: #{tpu_custom_call.1} parent=1 // pred_region
      %52 = dma.done [#allocation4], 128
    $region17: #{tpu_custom_call.1} parent=1 // pred_fallthru
      _
    %53 = vsyncpa [#allocation3], 1
    %54 = vsyncpa [#allocation4], 1

</llo_original>
